<compile_context>
chip_gen: v6e
topology: v6e:2x2x1
jax: 0.10.0
libtpu: 0.0.40
codegen_flags: <defaults>
</compile_context>

<pallas_src>
import numpy as np
import jax
import jax.numpy as jnp
from jax.experimental import pallas as pl
from jax.experimental.pallas import tpu as pltpu


_LANE = 128
_SUBLANE = 8
_MAX_TILE_B = 512   # measured sweet spot for memory-bound tiles


# ---------------------------------------------------------------------------
# Activation coefficients (resolved at Python level from action_bounds)
# ---------------------------------------------------------------------------
def _activation_coeffs(action_bounds):
    """Per-action epilogue coefficients.

    out = post_scale * tanh(raw') + raw_scale * raw' + post_bias
    with raw' = x @ (pre * W)^T + pre * b, where
      tanh col    : pre=1.0, post_scale=1.0, post_bias=0.0, raw_scale=0.0
      sigmoid col : pre=0.5, post_scale=0.5, post_bias=0.5, raw_scale=0.0
                    (sigmoid(x) = 0.5 * (tanh(0.5 x) + 1))
      other col   : pre=1.0, post_scale=0.0, post_bias=0.0, raw_scale=1.0
                    (raw passthrough; PyTorch leaves these uninitialized —
                     documented, benign divergence)
    """
    tanh_cols = np.array([lo == -1 and hi == 1 for lo, hi in action_bounds])
    sig_cols = np.array([lo == 0 and hi == 1 for lo, hi in action_bounds])
    sig_cols = sig_cols & ~tanh_cols                      # mutually exclusive
    if not (tanh_cols.any() or sig_cols.any()):
        raise ValueError("No dimensions matched (-1,1) or (0,1) bounds.")
    other = ~(tanh_cols | sig_cols)
    pre = np.where(sig_cols, 0.5, 1.0).astype(np.float32)
    post_scale = np.where(tanh_cols, 1.0,
                          np.where(sig_cols, 0.5, 0.0)).astype(np.float32)
    post_bias = np.where(sig_cols, 0.5, 0.0).astype(np.float32)
    raw_scale = np.where(other, 1.0, 0.0).astype(np.float32)
    return pre, post_scale, post_bias, raw_scale


# ---------------------------------------------------------------------------
# Parameter packing (masks / pre-scales baked here, outside the kernel)
# ---------------------------------------------------------------------------
def pack_policy_params(w, b, action_bounds, dtype=jnp.bfloat16):
    """w: (A, D) as in nn.Linear, b: (A,).

    Returns a single (A_pad, D+1) operand: rows [0:A] hold the pre-scaled W
    with the pre-scaled bias in the last column; rows [A:A_pad] are zero
    (sublane padding so the MXU M dim and the output stores are 8-aligned).
    """
    w = np.asarray(w, np.float32)
    b = np.asarray(b, np.float32)
    A, D = w.shape
    assert b.shape == (A,) and len(action_bounds) == A
    pre, _, _, _ = _activation_coeffs(action_bounds)
    a_pad = max(_SUBLANE, ((A + _SUBLANE - 1) // _SUBLANE) * _SUBLANE)
    packed = np.zeros((a_pad, D + 1), np.float32)
    packed[:A, :D] = w * pre[:, None]
    packed[:A, D] = b * pre
    return jnp.asarray(packed, dtype)


# ---------------------------------------------------------------------------
# Kernel
# ---------------------------------------------------------------------------
def _make_policy_kernel(D, A, a_pad, action_bounds):
    """Kernel over one lane-dense batch tile.

    Refs:
      xt_ref : (D, tile_b)       x^T, batch on lanes
      wb_ref : (a_pad, D+1)      packed [pre*W | pre*b]
      o_ref  : (a_pad, tile_b)   actions^T
    """
    _, post_scale, post_bias, raw_scale = _activation_coeffs(action_bounds)
    ps = np.zeros((a_pad,), np.float32); ps[:A] = post_scale
    pb = np.zeros((a_pad,), np.float32); pb[:A] = post_bias
    rs = np.zeros((a_pad,), np.float32); rs[:A] = raw_scale

    # Group contiguous rows sharing coefficients so the trace-time-unrolled
    # epilogue is a couple of static row-slices with scalar constants only
    # (no mask tensors, no constant-array operands).
    runs = []   # (start, stop, (post_scale, post_bias, raw_scale))
    for i in range(a_pad):
        coef = (float(ps[i]), float(pb[i]), float(rs[i]))
        if runs and runs[-1][1] == i and runs[-1][2] == coef:
            runs[-1] = (runs[-1][0], i + 1, coef)
        else:
            runs.append((i, i + 1, coef))

    def kernel(xt_ref, wb_ref, o_ref):
        w = wb_ref[:, :D]                        # (a_pad, D)  static slice
        bias = wb_ref[:, D:D + 1]                # (a_pad, 1)
        # raw^T = W' @ x^T + b' on the MXU, f32 accumulation.
        raw = jnp.dot(w, xt_ref[...], preferred_element_type=jnp.float32)
        raw = raw + bias.astype(jnp.float32)
        t = jnp.tanh(raw)                        # one EUP transcendental/elem
        # Per-row-group affine epilogue, coefficients baked at trace time.
        for s, e, (ps_i, pb_i, rs_i) in runs:
            row = t[s:e, :] * ps_i
            if rs_i != 0.0:
                row = row + raw[s:e, :] * rs_i
            if pb_i != 0.0:
                row = row + pb_i
            o_ref[s:e, :] = row.astype(o_ref.dtype)

    return kernel


# ---------------------------------------------------------------------------
# Wrapper
# ---------------------------------------------------------------------------
def _pick_batch_tile(B):
    """Fixed, lane-aligned batch tiling with a cdiv grid."""
    if B <= 2 * _LANE:
        return B, B                              # single full block, no pad
    # Tile is a multiple of 128 lanes, capped at _MAX_TILE_B, and at most
    # ~half of B so the "parallel" grid has >= 2 steps (v7x megacore).
    half = pl.cdiv(B, 2)
    tile = min(_MAX_TILE_B, pl.cdiv(half, _LANE) * _LANE)
    b_pad = pl.cdiv(B, tile) * tile
    return tile, b_pad


def policy_net_forward_t(x_t, packed, action_bounds):
    """Lane-dense path: x_t (D, B) -> actions^T (A, B), batch on lanes."""
    D, B = x_t.shape
    a_pad = packed.shape[0]
    A = len(action_bounds)
    assert packed.shape == (a_pad, D + 1) and A <= a_pad

    x_t = x_t.astype(packed.dtype)               # bf16 (or f32) DMA/MXU input
    tile_b, b_pad = _pick_batch_tile(B)
    if b_pad != B:
        x_t = jnp.pad(x_t, ((0, 0), (0, b_pad - B)))
    nb = b_pad // tile_b

    out_t = pl.pallas_call(
        _make_policy_kernel(D, A, a_pad, action_bounds),
        out_shape=jax.ShapeDtypeStruct((a_pad, b_pad), jnp.float32),
        grid=(nb,),
        in_specs=[
            pl.BlockSpec((D, tile_b), lambda i: (0, i)),      # x^T tile
            pl.BlockSpec((a_pad, D + 1), lambda i: (0, 0)),   # packed W/b
        ],
        out_specs=pl.BlockSpec((a_pad, tile_b), lambda i: (0, i)),
        compiler_params=pltpu.CompilerParams(
            dimension_semantics=("parallel",)),
    )(x_t, packed)
    return out_t[:A, :B]


def policy_net_forward(x, packed, action_bounds):
    """Drop-in (B, D) -> (B, A) wrapper around the lane-dense kernel."""
    # TODO(synk): have the MDN-RNN / rollout producer emit x as (D, B) and
    # consume (A, B) directly so these wrapper transposes disappear.
    return policy_net_forward_t(x.T, packed, action_bounds).T


# ---------------------------------------------------------------------------
# Reference + init
# ---------------------------------------------------------------------------
def init_policy_params(key, input_size, action_bounds):
    """nn.Linear default init: U(-1/sqrt(in), 1/sqrt(in))."""
    act_dim = len(action_bounds)
    kw, kb = jax.random.split(key)
    bound = 1.0 / np.sqrt(float(input_size))
    w = jax.random.uniform(kw, (act_dim, input_size), jnp.float32, -bound, bound)
    b = jax.random.uniform(kb, (act_dim,), jnp.float32, -bound, bound)
    return w, b


def reference_forward(x, w, b, action_bounds):
    raw = jnp.dot(x, w.T, precision=jax.lax.Precision.HIGHEST) + b
    tanh_mask = np.array([lo == -1 and hi == 1 for lo, hi in action_bounds])
    sig_mask = np.array([lo == 0 and hi == 1 for lo, hi in action_bounds])
    sig_mask = sig_mask & ~tanh_mask
    return jnp.where(jnp.asarray(tanh_mask), jnp.tanh(raw),
                     jnp.where(jnp.asarray(sig_mask), jax.nn.sigmoid(raw), raw))


# ---------------------------------------------------------------------------
# Demo / self-check
# ---------------------------------------------------------------------------
if __name__ == "__main__":
    # (steer, gas, brake): steer in (-1, 1), gas/brake in (0, 1)
    action_bounds = [(-1.0, 1.0), (0.0, 1.0), (0.0, 1.0)]
    B = 2                                   # batch
    latent_dim = 16                         # z_t
    hidden_dim = 32                         # h_t
    input_size = latent_dim + hidden_dim    # concatenated [z_t, h_t]

    key = jax.random.PRNGKey(0)
    kx, kp, kx2 = jax.random.split(key, 3)
    x = jax.random.normal(kx, (B, input_size), jnp.float32)
    w, b = init_policy_params(kp, input_size, action_bounds)
    ref = reference_forward(x, w, b, action_bounds)

    # --- f32 path, tiny batch: single full block ----------------------------
    packed_f32 = pack_policy_params(w, b, action_bounds, dtype=jnp.float32)
    out = jax.block_until_ready(policy_net_forward(x, packed_f32, action_bounds))
    assert out.shape == (B, len(action_bounds))
    assert jnp.allclose(out, ref, atol=5e-3, rtol=5e-3), (out, ref)

    # --- bf16 DMA/MXU path (production default), tiny batch -----------------
    packed_bf16 = pack_policy_params(w, b, action_bounds)        # bf16 default
    out_bf = jax.block_until_ready(
        policy_net_forward(x, packed_bf16, action_bounds))
    assert jnp.allclose(out_bf, ref, atol=5e-2, rtol=5e-2)

    # --- large ragged batch: cdiv grid + padding + >=2 parallel steps -------
    Bbig = 1000
    xb = jax.random.normal(kx2, (Bbig, input_size), jnp.float32)
    refb = reference_forward(xb, w, b, action_bounds)

    outb_f32 = jax.block_until_ready(
        policy_net_forward(xb, packed_f32, action_bounds))
    assert outb_f32.shape == (Bbig, len(action_bounds))
    assert jnp.allclose(outb_f32, refb, atol=5e-3, rtol=5e-3)

    outb_bf = jax.block_until_ready(
        policy_net_forward(xb, packed_bf16, action_bounds))
    assert jnp.allclose(outb_bf, refb, atol=5e-2, rtol=5e-2)

    # --- lane-dense producer/consumer path: (D, B) in, (A, B) out -----------
    outt = jax.block_until_ready(
        policy_net_forward_t(xb.T, packed_bf16, action_bounds))
    assert outt.shape == (len(action_bounds), Bbig)
    assert jnp.allclose(outt, refb.T, atol=5e-2, rtol=5e-2)

    print("KERNEL_OK")
</pallas_src>

<mosaic_0001>
module attributes {stable_mosaic.version = 11 : i64} {
  func.func @kernel(%arg0: i32, %arg1: memref<48x2xf32, #tpu.memory_space<vmem>>, %arg2: memref<8x49xf32, #tpu.memory_space<vmem>>, %arg3: memref<8x2xf32, #tpu.memory_space<vmem>>) attributes {dimension_semantics = [#tpu.dimension_semantics<parallel>], iteration_bounds = array<i64: 1>, scalar_prefetch = 0 : i64, scratch_operands = 0 : i64, tpu.core_type = #tpu.core_type<tc>, window_params = [{transform_indices = @transform_0, window_bounds = array<i64: 48, 2>}, {pipeline_mode = #tpu.pipeline_mode<synchronous>, transform_indices = @transform_1, window_bounds = array<i64: 8, 49>}, {transform_indices = @transform_2, window_bounds = array<i64: 8, 2>}]} {
    %c0 = arith.constant 0 : index
    %c0_0 = arith.constant 0 : index
    %0 = vector.load %arg2[%c0, %c0_0] : memref<8x49xf32, #tpu.memory_space<vmem>>, vector<8x48xf32>
    %c0_1 = arith.constant 0 : index
    %c48 = arith.constant 48 : index
    %1 = vector.load %arg2[%c0_1, %c48] : memref<8x49xf32, #tpu.memory_space<vmem>>, vector<8x1xf32>
    %c0_2 = arith.constant 0 : index
    %c0_3 = arith.constant 0 : index
    %2 = vector.load %arg1[%c0_2, %c0_3] : memref<48x2xf32, #tpu.memory_space<vmem>>, vector<48x2xf32>
    %cst = arith.constant dense<0.000000e+00> : vector<8x2xf32>
    %3 = tpu.matmul %0, %2, %cst {dimension_numbers = #tpu.dot_dimension_numbers<[1], [0], [0], [1], [0, 0, 1, 1], [], []>} : vector<8x48xf32>, vector<48x2xf32>, vector<8x2xf32> -> vector<8x2xf32>
    %4 = vector.broadcast %1 : vector<8x1xf32> to vector<8x2xf32>
    %5 = arith.addf %3, %4 : vector<8x2xf32>
    %6 = math.tanh %5 : vector<8x2xf32>
    %7 = vector.extract_strided_slice %6 {offsets = [0, 0], sizes = [1, 2], strides = [1, 1]} : vector<8x2xf32> to vector<1x2xf32>
    %cst_4 = arith.constant 1.000000e+00 : f32
    %8 = vector.broadcast %cst_4 : f32 to vector<1x2xf32>
    %9 = arith.mulf %7, %8 : vector<1x2xf32>
    %c0_5 = arith.constant 0 : index
    %c0_6 = arith.constant 0 : index
    %10 = vector.load %arg3[%c0_5, %c0_6] : memref<8x2xf32, #tpu.memory_space<vmem>>, vector<1x2xf32>
    tpu.vector_store %arg3[%c0_5, %c0_6], %9 {strides = array<i32>} : memref<8x2xf32, #tpu.memory_space<vmem>>, vector<1x2xf32>,
    %11 = vector.extract_strided_slice %6 {offsets = [1, 0], sizes = [2, 2], strides = [1, 1]} : vector<8x2xf32> to vector<2x2xf32>
    %cst_7 = arith.constant 5.000000e-01 : f32
    %12 = vector.broadcast %cst_7 : f32 to vector<2x2xf32>
    %13 = arith.mulf %11, %12 : vector<2x2xf32>
    %cst_8 = arith.constant 5.000000e-01 : f32
    %14 = vector.broadcast %cst_8 : f32 to vector<2x2xf32>
    %15 = arith.addf %13, %14 : vector<2x2xf32>
    %c1 = arith.constant 1 : index
    %c0_9 = arith.constant 0 : index
    %16 = vector.load %arg3[%c1, %c0_9] : memref<8x2xf32, #tpu.memory_space<vmem>>, vector<2x2xf32>
    tpu.vector_store %arg3[%c1, %c0_9], %15 {strides = array<i32>} : memref<8x2xf32, #tpu.memory_space<vmem>>, vector<2x2xf32>,
    %17 = vector.extract_strided_slice %6 {offsets = [3, 0], sizes = [5, 2], strides = [1, 1]} : vector<8x2xf32> to vector<5x2xf32>
    %cst_10 = arith.constant 0.000000e+00 : f32
    %18 = vector.broadcast %cst_10 : f32 to vector<5x2xf32>
    %19 = arith.mulf %17, %18 : vector<5x2xf32>
    %c3 = arith.constant 3 : index
    %c0_11 = arith.constant 0 : index
    %20 = vector.load %arg3[%c3, %c0_11] : memref<8x2xf32, #tpu.memory_space<vmem>>, vector<5x2xf32>
    tpu.vector_store %arg3[%c3, %c0_11], %19 {strides = array<i32>} : memref<8x2xf32, #tpu.memory_space<vmem>>, vector<5x2xf32>,
    return
  }
  func.func @transform_0(%arg0: i32) -> (i32, i32) {
    %c0_i32 = arith.constant 0 : i32
    %c0_i32_0 = arith.constant 0 : i32
    return %c0_i32, %arg0 : i32, i32
  }
  func.func @transform_1(%arg0: i32) -> (i32, i32) {
    %c0_i32 = arith.constant 0 : i32
    %c0_i32_0 = arith.constant 0 : i32
    %c0_i32_1 = arith.constant 0 : i32
    return %c0_i32, %c0_i32_0 : i32, i32
  }
  func.func @transform_2(%arg0: i32) -> (i32, i32) {
    %c0_i32 = arith.constant 0 : i32
    %c0_i32_0 = arith.constant 0 : i32
    return %c0_i32, %arg0 : i32, i32
  }
}

</mosaic_0001>

<llo_original>
// kernel: tpu_custom_call.1
$region0: #{tpu_custom_call.1}
  #allocation0 [shape = 'u32[]', space=smem, size = 0x4, offset = 0x4, fixed_abs, tag = 'smem constant byte address 0x4 - core index']
  #allocation1 [shape = 'u32[144,128]{1,0:T(1,128)}', space=vmem, size = 0x12000, scoped, tag = 'internal scratch']
  %s0 = inlined_call_operand.vmem [shape: f32[48,2], index: 0, kind: input, shape index: {}]
  %s1 = inlined_call_operand.vmem [shape: f32[8,49], index: 1, kind: input, shape index: {}]
  %s2 = inlined_call_operand.vmem [shape: f32[8,2], index: 2, kind: output, shape index: {}]
  %s3 = sld [smem:[#allocation0]]
  $region18: #{tpu_custom_call.1} parent=0
    _
  %s5 = ssub.s32 1, %s3
  %s6 = scalar_select 0, %s5, %s3
  // Predicated region
  $region2: #{tpu_custom_call.1} parent=0 // pred_check
    _
  $region3: #{tpu_custom_call.1} parent=0 // pred_check_branch
    %8 = sbr.rel (0) target = $region5
  $region4: #{tpu_custom_call.1} parent=0 // pred_region
    _
  $region5: #{tpu_custom_call.1} parent=0 // pred_fallthru
    _
  // Predicated region
  $region6: #{tpu_custom_call.1} parent=0 // pred_check
    _
  $region7: #{tpu_custom_call.1} parent=0 // pred_check_branch
    %10 = sbr.rel (0) target = $region9
  $region8: #{tpu_custom_call.1} parent=0 // pred_region
    _
  $region9: #{tpu_custom_call.1} parent=0 // pred_fallthru
    _
  %v11 = vld [vmem:[%s1] sm:$0xff]
  %v12 = vld [vmem:[%s0] sm:$0xff]
  %v13 = vld [vmem:[%s0 + $0x8] sm:$0xff]
  %v14 = vld [vmem:[%s0 + $0x10] sm:$0xff]
  %v15 = vld [vmem:[%s0 + $0x18] sm:$0xff]
  %v16 = vld [vmem:[%s0 + $0x20] sm:$0xff]
  %v17 = vld [vmem:[%s0 + $0x28] sm:$0xff]
  %19 = vset.pattern.permute.xlu0 48
  %20 = vperm.xlu0 %19, %v11
  %v21 = vpop.permute.xlu0 %20
  %vm23 = vcmask 392192
  %v24 = vsel %vm23, %v11, 0
  %26 = vmatprep.subr.mxu0 0.0
  %27 = vmatpush1.msra.mxu0 0.0
  %28 = vmatprep.subr.mxu0 0.0
  %29 = vmatpush1.msra.mxu0 0.0
  %30 = vmatprep.subr.mxu0 0.0
  %31 = vmatpush1.msra.mxu0 0.0
  %32 = vmatprep.subr.mxu0 0.0
  %33 = vmatpush1.msra.mxu0 0.0
  %34 = vmatprep.subr.mxu0 0.0
  %35 = vmatpush1.msra.mxu0 0.0
  %36 = vmatprep.subr.mxu0 0.0
  %37 = vmatpush1.msra.mxu0 0.0
  %38 = vmatprep.subr.mxu0 0.0
  %39 = vmatpush1.msra.mxu0 0.0
  %40 = vmatprep.subr.mxu0 0.0
  %41 = vmatpush1.msra.mxu0 0.0
  %42 = vmatprep.subr.mxu0 0.0
  %43 = vmatpush1.msra.mxu0 0.0
  %44 = vmatprep.subr.mxu0 0.0
  %45 = vmatpush1.msra.mxu0 0.0
  %46 = vmatprep.subr.mxu0 0.0
  %47 = vmatpush1.msra.mxu0 %v17
  %48 = vmatprep.subr.mxu0 0.0
  %49 = vmatpush1.msra.mxu0 %v16
  %50 = vmatprep.subr.mxu0 0.0
  %51 = vmatpush1.msra.mxu0 %v15
  %52 = vmatprep.subr.mxu0 0.0
  %53 = vmatpush1.msra.mxu0 %v14
  %54 = vmatprep.subr.mxu0 0.0
  %55 = vmatpush1.msra.mxu0 %v13
  %56 = vmatprep.subr.mxu0 0.0
  %57 = vmatpush1.msra.mxu0 %v12
  %58 = vmatprep.subr.mxu0 0.0
  %59 = vmatpush2.msra.mxu0 0.0
  %60 = vmatprep.subr.mxu0 0.0
  %61 = vmatpush2.msra.mxu0 0.0
  %62 = vmatprep.subr.mxu0 0.0
  %63 = vmatpush2.msra.mxu0 0.0
  %64 = vmatprep.subr.mxu0 0.0
  %65 = vmatpush2.msra.mxu0 0.0
  %66 = vmatprep.subr.mxu0 0.0
  %67 = vmatpush2.msra.mxu0 0.0
  %68 = vmatprep.subr.mxu0 0.0
  %69 = vmatpush2.msra.mxu0 0.0
  %70 = vmatprep.subr.mxu0 0.0
  %71 = vmatpush2.msra.mxu0 0.0
  %72 = vmatprep.subr.mxu0 0.0
  %73 = vmatpush2.msra.mxu0 0.0
  %74 = vmatprep.subr.mxu0 0.0
  %75 = vmatpush2.msra.mxu0 0.0
  %76 = vmatprep.subr.mxu0 0.0
  %77 = vmatpush2.msra.mxu0 0.0
  %78 = vmatprep.subr.mxu0 0.0
  %79 = vmatpush2.msra.mxu0 0.0
  %80 = vmatprep.subr.mxu0 0.0
  %81 = vmatpush2.msra.mxu0 0.0
  %82 = vmatprep.subr.mxu0 0.0
  %83 = vmatpush2.msra.mxu0 0.0
  %84 = vmatprep.subr.mxu0 0.0
  %85 = vmatpush2.msra.mxu0 0.0
  %86 = vmatprep.subr.mxu0 0.0
  %87 = vmatpush2.msra.mxu0 0.0
  %88 = vmatprep.subr.mxu0 0.0
  %89 = vmatpush2.msra.mxu0 0.0
  %90 = vmatprep.mubr.f32.mxu0 0.0
  %91 = vmatmul.mubr.f32.gmra.mxu0 %v24
  %v92 = vpop.f32.mrf.mxu0
  %v93 = vadd.f32 %v21, %v92
  %v94 = vpop.f32.mrf.mxu0
  %95 = vdwg.mxu0
  %v96 = vtanh.pop %v93
  %vm97 = vcmask 8192
  %98 = vst.msk [vmem:[%s2] sm:$0x1] %vm97, %v96
  %v99 = vmul.f32 %v96, 0.5
  %v100 = vadd.f32 %v99, 0.5
  %vm101 = vcmask 10241
  %102 = vst.msk [vmem:[%s2] sm:$0x6] %vm101, %v100
  %v103 = vmul.f32 %v96, 0.0
  %vm104 = vcmask 15363
  %105 = vst.msk [vmem:[%s2] sm:$0xf8] %vm104, %v103
  // Predicated region
  $region10: #{tpu_custom_call.1} parent=0 // pred_check
    _
  $region11: #{tpu_custom_call.1} parent=0 // pred_check_branch
    %107 = sbr.rel (0) target = $region13
  $region12: #{tpu_custom_call.1} parent=0 // pred_region
    _
  $region13: #{tpu_custom_call.1} parent=0 // pred_fallthru
    _
  // Predicated region
  $region14: #{tpu_custom_call.1} parent=0 // pred_check
    _
  $region15: #{tpu_custom_call.1} parent=0 // pred_check_branch
    %109 = sbr.rel (0) target = $region17
  $region16: #{tpu_custom_call.1} parent=0 // pred_region
    _
  $region17: #{tpu_custom_call.1} parent=0 // pred_fallthru
    _

</llo_original>
